<compile_context>
chip_gen: v7x
topology: tpu7x:2x2x1
jax: 0.10.0
libtpu: 0.0.40
codegen_flags: <defaults>
</compile_context>

<pallas_src>
import functools

import jax
import jax.numpy as jnp
from jax.experimental import pallas as pl
from jax.experimental.pallas import tpu as pltpu


KH = KW = 3  # inner model: Conv2d(C -> COUT, 3x3, padding=1) + ReLU


def _fake_quant_u8(x, s_in, zp_in):
    """QuantStub: per-tensor affine quantization onto the quint8 grid (float q)."""
    return jnp.clip(jnp.round(x * (1.0 / s_in)) + zp_in, 0.0, 255.0)


def _requant_conv_kernel(scal_ref, p_ref, w_ref, b_ref, o_ref):
    """Band-Toeplitz conv + requant + dequant epilogue.

    scal_ref: SMEM f32[4] = [acc_scale, 1/s_out, zp_out, s_out]
    p_ref:    [rows, K]    int8 (v5e/v6e path) or bf16 (v7x path) patches
    w_ref:    [K, lanes]   int8 / bf16 Toeplitz weight
    b_ref:    [1, lanes]   f32 effective bias (zero-point correction pre-folded)
    o_ref:    [rows, lanes] f32 dequantized output (lane-dense)
    """
    if jnp.issubdtype(p_ref.dtype, jnp.integer):
        acc = jnp.dot(p_ref[...], w_ref[...],
                      preferred_element_type=jnp.int32).astype(jnp.float32)
    else:
        acc = jnp.dot(p_ref[...], w_ref[...],
                      preferred_element_type=jnp.float32)
    y = acc * scal_ref[0] + b_ref[...]
    # ReLU folded into the requant clip floor:
    #   quantize(relu(y)) == clip(round(y / s_out) + zp_out, zp_out, 255).
    q = jnp.clip(jnp.round(y * scal_ref[1]) + scal_ref[2], scal_ref[2], 255.0)
    # DeQuantStub back to float32.
    o_ref[...] = ((q - scal_ref[2]) * scal_ref[3]).astype(o_ref.dtype)


def _toeplitz_weight(w_oihw, out_w):
    """[Cout,Cin,KH,KW] -> band-Toeplitz matrix [KH*Wp*Cin, out_w*Cout]."""
    cout, cin, kh, kw = w_oihw.shape
    wp = out_w + 2
    w_t = jnp.transpose(w_oihw, (2, 3, 1, 0))                        # [KH,KW,Cin,Cout]
    kw_rel = jnp.arange(wp)[:, None] - jnp.arange(out_w)[None, :]    # [Wp,W]
    valid = (kw_rel >= 0) & (kw_rel < kw)
    gath = w_t[:, jnp.clip(kw_rel, 0, kw - 1)]                       # [KH,Wp,W,Cin,Cout]
    gath = jnp.where(valid[None, :, :, None, None], gath, 0.0)
    return jnp.transpose(gath, (0, 1, 3, 2, 4)).reshape(kh * wp * cin, out_w * cout)


def prepare_quantized_weights(weight, bias, out_w):
    """One-time (model-load) precompute: weight quant + Toeplitz build + bias row."""
    s_w = max(float(jnp.max(jnp.abs(weight))), 1e-8) / 127.0
    q_w = jnp.clip(jnp.round(weight / s_w), -127.0, 127.0)           # int values, f32
    toep_q = _toeplitz_weight(q_w, out_w)                            # [k_band, lanes]
    k_band, n_lanes = toep_q.shape
    k_pad = ((k_band + 127) // 128) * 128                            # 216 -> 256
    toep_q = jnp.pad(toep_q, ((0, k_pad - k_band), (0, 0)))
    return dict(
        w_toep_i8=toep_q.astype(jnp.int8),                           # v4/v5e/v6e operand
        w_toep_bf16=(toep_q * s_w).astype(jnp.bfloat16),             # v7x operand
        w_colsum=jnp.sum(toep_q, axis=0, keepdims=True).astype(jnp.float32),
        b_row=jnp.tile(bias, out_w).reshape(1, n_lanes).astype(jnp.float32),
        w_dq=(q_w * s_w).astype(jnp.float32),                        # for the reference
        s_w=s_w,
    )


def _band_patches(vals_nchw, pad_val, k_pad, out_dtype):
    """NCHW values -> band-im2col patches [N*H, k_pad] (3 kh-shifted row bands)."""
    n, c, h, w = vals_nchw.shape
    x_nhwc = jnp.transpose(vals_nchw, (0, 2, 3, 1))
    x_pad = jnp.pad(x_nhwc, ((0, 0), (1, 1), (1, 1), (0, 0)),
                    constant_values=pad_val)
    bands = jnp.stack([x_pad[:, i:i + h] for i in range(KH)], axis=2)  # [N,H,KH,Wp,C]
    k_band = KH * (w + 2) * c
    patches = bands.reshape(n * h, k_band)
    return jnp.pad(patches, ((0, 0), (0, k_pad - k_band))).astype(out_dtype)


@functools.partial(jax.jit, static_argnames=("int8_path",))
def quantized_model_forward(x, w_toep, b_row, w_colsum, s_w,
                            s_in, zp_in, s_out, zp_out, *, int8_path):
    """x: [N,C,H,W] f32 -> [N,Cout,H,W] f32 (quant -> conv+relu -> requant -> dequant)."""
    n, c, h, w = x.shape
    k_pad, n_lanes = w_toep.shape
    cout = n_lanes // w
    rows = n * h

    q = _fake_quant_u8(x, s_in, zp_in)                     # QuantStub (quint8 grid)
    if int8_path:
        # Integer-MXU path: shift quint8 -> int8 ([-128,127]); the shift and the
        # input zero-point contributions are folded into the bias row.
        vals, pad_val, patch_dtype = q - 128.0, zp_in - 128.0, jnp.int8
        mult = s_in * s_w
        b_eff = b_row + (128.0 - zp_in) * w_colsum * mult
    else:
        # bf16 path (v7x MXU has no integer datapath): dequantized operands.
        vals, pad_val, patch_dtype = (q - zp_in) * s_in, 0.0, jnp.bfloat16
        mult = 1.0
        b_eff = b_row

    patches = _band_patches(vals, pad_val, k_pad, patch_dtype)       # [rows, k_pad]

    # Runtime quant params -> SMEM scalars (no recompile when calibration changes).
    scal = jnp.stack([jnp.asarray(v, dtype=jnp.float32)
                      for v in (mult, 1.0 / s_out, zp_out, s_out)])

    out_flat = pl.pallas_call(
        _requant_conv_kernel,
        out_shape=jax.ShapeDtypeStruct((rows, n_lanes), jnp.float32),
        grid=(1,),  # single step: whole problem is one MXU tile, ~0.1 MB of VMEM
        in_specs=[
            pl.BlockSpec(memory_space=pltpu.MemorySpace.SMEM),       # quant scalars
            pl.BlockSpec((rows, k_pad), lambda i: (0, 0)),
            pl.BlockSpec((k_pad, n_lanes), lambda i: (0, 0)),
            pl.BlockSpec((1, n_lanes), lambda i: (0, 0)),
        ],
        out_specs=pl.BlockSpec((rows, n_lanes), lambda i: (0, 0)),
        compiler_params=pltpu.CompilerParams(
            dimension_semantics=("arbitrary",)),
    )(scal, patches, w_toep, b_eff)

    # Tiny layout plumbing back to PyTorch's NCHW convention.
    out = out_flat.reshape(n, h, w, cout)
    return jnp.transpose(out, (0, 3, 1, 2))


def _reference_forward(x, w_dq, bias, s_in, zp_in, s_out, zp_out):
    """Pure-JAX reference with identical quantization semantics."""
    x_dq = (_fake_quant_u8(x, s_in, zp_in) - zp_in) * s_in
    y = jax.lax.conv_general_dilated(
        x_dq, w_dq, window_strides=(1, 1), padding="SAME",
        dimension_numbers=("NCHW", "OIHW", "NCHW"),
        precision=jax.lax.Precision.HIGHEST)
    y = jnp.maximum(y + bias.reshape(1, -1, 1, 1), 0.0)
    qo = jnp.clip(jnp.round(y * (1.0 / s_out)) + zp_out, 0.0, 255.0)
    return (qo - zp_out) * s_out


def _mxu_has_int8():
    """v4/v5/v6 MXUs have an integer datapath; v7x is fp8/bf16 only."""
    try:
        kind = jax.devices()[0].device_kind.lower()
    except Exception:
        return False
    if "v7" in kind:
        return False
    return any(tag in kind for tag in ("v4", "v5", "v6"))


if __name__ == "__main__":
    N, C, H, W = 2, 4, 16, 16
    COUT = 8

    kx, kwt, kb = jax.random.split(jax.random.PRNGKey(0), 3)
    x = jax.random.normal(kx, (N, C, H, W), dtype=jnp.float32)
    weight = 0.1 * jax.random.normal(kwt, (COUT, C, KH, KW), dtype=jnp.float32)
    bias = 0.05 * jax.random.normal(kb, (COUT,), dtype=jnp.float32)

    # Calibration (PyTorch default static observers) from the data range.  These
    # are runtime values, not static jit args -> recalibration never recompiles.
    x_min = jnp.minimum(x.min(), 0.0)
    x_max = jnp.maximum(x.max(), 0.0)
    s_in = (x_max - x_min) / 255.0
    zp_in = jnp.round(-x_min / s_in)
    s_out, zp_out = 0.05, 0.0  # TODO(synk): a real flow calibrates these with observers

    prep = prepare_quantized_weights(weight, bias, W)  # once, at model-load time

    def run(int8_path):
        w_toep = prep["w_toep_i8"] if int8_path else prep["w_toep_bf16"]
        out = quantized_model_forward(
            x, w_toep, prep["b_row"], prep["w_colsum"], prep["s_w"],
            s_in, zp_in, s_out, zp_out, int8_path=int8_path)
        return jax.block_until_ready(out)

    use_int8 = _mxu_has_int8()
    try:
        out = run(use_int8)
    except Exception:
        if not use_int8:
            raise
        out = run(False)  # bf16 fallback if the int8 MXU path does not lower here

    ref = _reference_forward(x, prep["w_dq"], bias, s_in, zp_in, s_out, zp_out)
    assert out.shape == (N, COUT, H, W)
    # Both outputs live on the s_out quantization grid; allow one grid step of
    # slack for rounding-tie flips (bf16 operands / f32-vs-int epilogue ordering).
    max_diff = float(jnp.max(jnp.abs(out - ref)))
    assert max_diff <= 1.5 * s_out, f"max_diff={max_diff}"

    print("KERNEL_OK")
</pallas_src>

<mosaic_0001>
module attributes {stable_mosaic.version = 11 : i64} {
  func.func @_requant_conv_kernel(%arg0: i32, %arg1: memref<4xf32, #tpu.memory_space<smem>>, %arg2: memref<32x256xbf16, #tpu.memory_space<vmem>>, %arg3: memref<256x128xbf16, #tpu.memory_space<vmem>>, %arg4: memref<1x128xf32, #tpu.memory_space<vmem>>, %arg5: memref<32x128xf32, #tpu.memory_space<vmem>>) attributes {dimension_semantics = [#tpu.dimension_semantics<arbitrary>], iteration_bounds = array<i64: 1>, scalar_prefetch = 0 : i64, scratch_operands = 0 : i64, tpu.core_type = #tpu.core_type<tc>, window_params = [{transform_indices = @transform_0, window_bounds = array<i64: 4>}, {pipeline_mode = #tpu.pipeline_mode<synchronous>, transform_indices = @transform_1, window_bounds = array<i64: 32, 256>}, {pipeline_mode = #tpu.pipeline_mode<synchronous>, transform_indices = @transform_2, window_bounds = array<i64: 256, 128>}, {pipeline_mode = #tpu.pipeline_mode<synchronous>, transform_indices = @transform_3, window_bounds = array<i64: 1, 128>}, {pipeline_mode = #tpu.pipeline_mode<synchronous>, transform_indices = @transform_4, window_bounds = array<i64: 32, 128>}]} {
    %c0 = arith.constant 0 : index
    %c0_0 = arith.constant 0 : index
    %0 = vector.load %arg2[%c0, %c0_0] : memref<32x256xbf16, #tpu.memory_space<vmem>>, vector<32x256xbf16>
    %c0_1 = arith.constant 0 : index
    %c0_2 = arith.constant 0 : index
    %1 = vector.load %arg3[%c0_1, %c0_2] : memref<256x128xbf16, #tpu.memory_space<vmem>>, vector<256x128xbf16>
    %cst = arith.constant dense<0.000000e+00> : vector<32x128xf32>
    %2 = tpu.matmul %0, %1, %cst {dimension_numbers = #tpu.dot_dimension_numbers<[1], [0], [0], [1], [0, 0, 1, 1], [], []>} : vector<32x256xbf16>, vector<256x128xbf16>, vector<32x128xf32> -> vector<32x128xf32>
    %c0_3 = arith.constant 0 : index
    %3 = memref.load %arg1[%c0_3] : memref<4xf32, #tpu.memory_space<smem>>
    %4 = vector.broadcast %3 : f32 to vector<32x128xf32>
    %5 = arith.mulf %2, %4 : vector<32x128xf32>
    %c0_4 = arith.constant 0 : index
    %c0_5 = arith.constant 0 : index
    %6 = vector.load %arg4[%c0_4, %c0_5] : memref<1x128xf32, #tpu.memory_space<vmem>>, vector<1x128xf32>
    %7 = vector.broadcast %6 : vector<1x128xf32> to vector<32x128xf32>
    %8 = arith.addf %5, %7 : vector<32x128xf32>
    %c1 = arith.constant 1 : index
    %9 = memref.load %arg1[%c1] : memref<4xf32, #tpu.memory_space<smem>>
    %10 = vector.broadcast %9 : f32 to vector<32x128xf32>
    %11 = arith.mulf %8, %10 : vector<32x128xf32>
    %12 = math.roundeven %11 : vector<32x128xf32>
    %c2 = arith.constant 2 : index
    %13 = memref.load %arg1[%c2] : memref<4xf32, #tpu.memory_space<smem>>
    %14 = vector.broadcast %13 : f32 to vector<32x128xf32>
    %15 = arith.addf %12, %14 : vector<32x128xf32>
    %c2_6 = arith.constant 2 : index
    %16 = memref.load %arg1[%c2_6] : memref<4xf32, #tpu.memory_space<smem>>
    %cst_7 = arith.constant 2.550000e+02 : f32
    %17 = vector.broadcast %16 : f32 to vector<32x128xf32>
    %18 = arith.maximumf %17, %15 : vector<32x128xf32>
    %19 = vector.broadcast %cst_7 : f32 to vector<32x128xf32>
    %20 = arith.minimumf %19, %18 : vector<32x128xf32>
    %c2_8 = arith.constant 2 : index
    %21 = memref.load %arg1[%c2_8] : memref<4xf32, #tpu.memory_space<smem>>
    %22 = vector.broadcast %21 : f32 to vector<32x128xf32>
    %23 = arith.subf %20, %22 : vector<32x128xf32>
    %c3 = arith.constant 3 : index
    %24 = memref.load %arg1[%c3] : memref<4xf32, #tpu.memory_space<smem>>
    %25 = vector.broadcast %24 : f32 to vector<32x128xf32>
    %26 = arith.mulf %23, %25 : vector<32x128xf32>
    %c0_9 = arith.constant 0 : index
    %c0_10 = arith.constant 0 : index
    %27 = vector.load %arg5[%c0_9, %c0_10] : memref<32x128xf32, #tpu.memory_space<vmem>>, vector<32x128xf32>
    tpu.vector_store %arg5[%c0_9, %c0_10], %26 {strides = array<i32>} : memref<32x128xf32, #tpu.memory_space<vmem>>, vector<32x128xf32>,
    return
  }
  func.func @transform_0(%arg0: i32) -> i32 {
    %c0_i32 = arith.constant 0 : i32
    %c0_i32_0 = arith.constant 0 : i32
    return %c0_i32 : i32
  }
  func.func @transform_1(%arg0: i32) -> (i32, i32) {
    %c0_i32 = arith.constant 0 : i32
    %c0_i32_0 = arith.constant 0 : i32
    %c0_i32_1 = arith.constant 0 : i32
    return %c0_i32, %c0_i32_0 : i32, i32
  }
  func.func @transform_2(%arg0: i32) -> (i32, i32) {
    %c0_i32 = arith.constant 0 : i32
    %c0_i32_0 = arith.constant 0 : i32
    %c0_i32_1 = arith.constant 0 : i32
    return %c0_i32, %c0_i32_0 : i32, i32
  }
  func.func @transform_3(%arg0: i32) -> (i32, i32) {
    %c0_i32 = arith.constant 0 : i32
    %c0_i32_0 = arith.constant 0 : i32
    %c0_i32_1 = arith.constant 0 : i32
    return %c0_i32, %c0_i32_0 : i32, i32
  }
  func.func @transform_4(%arg0: i32) -> (i32, i32) {
    %c0_i32 = arith.constant 0 : i32
    %c0_i32_0 = arith.constant 0 : i32
    %c0_i32_1 = arith.constant 0 : i32
    return %c0_i32, %c0_i32_0 : i32, i32
  }
}

</mosaic_0001>

<llo_original>
// kernel: quantized_model_forward.1
$region0: #{quantized_model_forward.1}
  #allocation0 [shape = 'u32[]', space=smem, size = 0x4, offset = 0x4, fixed_abs, tag = 'smem constant byte address 0x4 - core index']
  #allocation1 [shape = 'u32[144,128]{1,0:T(1,128)}', space=vmem, size = 0x12000, scoped, tag = 'internal scratch']
  %s0 = inlined_call_operand.vmem [shape: f32[4], index: 0, kind: input, shape index: {}]
  %s1 = inlined_call_operand.vmem [shape: bf16[32,256], index: 1, kind: input, shape index: {}]
  %s2 = inlined_call_operand.vmem [shape: bf16[256,128], index: 2, kind: input, shape index: {}]
  %s3 = inlined_call_operand.vmem [shape: f32[1,128], index: 3, kind: input, shape index: {}]
  %s4 = inlined_call_operand.vmem [shape: f32[32,128], index: 4, kind: output, shape index: {}]
  %s5 = sld [smem:[#allocation0]]
  $region30: #{quantized_model_forward.1} parent=0
    _
  %s7 = ssub.s32 1, %s5
  %s8 = scalar_select 0, %s7, %s5
  $region1: #{quantized_model_forward.1} parent=0
    #allocation2 [shape = 'u8[512]{0}', space=smem, size = 0x200, scoped, tag = 'input window, operand 0, single buffered']
    #allocation3 [shape = 's32[1]{0}', space=sflag, size = 0x4, scoped, tag = 'scoped memory for quantized_model_forward.1']
    %9 = vsyncpa [#allocation3], 0
    // Predicated region
    $region2: #{quantized_model_forward.1} parent=1 // pred_check
      _
    $region3: #{quantized_model_forward.1} parent=1 // pred_check_branch
      %11 = sbr.rel (0) target = $region5
    $region4: #{quantized_model_forward.1} parent=1 // pred_region
      %s13 = ssub.s32 16, 16
      %14 = vsyncadd [#allocation3], %s13
      %s16 = sshll.u32 %s0, 4
      %s17 = int_to_ptr.vmem [resolvable:$true] %s16
      %19 = dma.vmem_to_smem %s17, 16, [#allocation2], [#allocation3]
    $region5: #{quantized_model_forward.1} parent=1 // pred_fallthru
      _
    // Predicated region
    $region6: #{quantized_model_forward.1} parent=1 // pred_check
      _
    $region7: #{quantized_model_forward.1} parent=1 // pred_check_branch
      %21 = sbr.rel (0) target = $region9
    $region8: #{quantized_model_forward.1} parent=1 // pred_region
      _
    $region9: #{quantized_model_forward.1} parent=1 // pred_fallthru
      _
    // Predicated region
    $region10: #{quantized_model_forward.1} parent=1 // pred_check
      _
    $region11: #{quantized_model_forward.1} parent=1 // pred_check_branch
      %23 = sbr.rel (0) target = $region13
    $region12: #{quantized_model_forward.1} parent=1 // pred_region
      _
    $region13: #{quantized_model_forward.1} parent=1 // pred_fallthru
      _
    // Predicated region
    $region14: #{quantized_model_forward.1} parent=1 // pred_check
      _
    $region15: #{quantized_model_forward.1} parent=1 // pred_check_branch
      %25 = sbr.rel (0) target = $region17
    $region16: #{quantized_model_forward.1} parent=1 // pred_region
      _
    $region17: #{quantized_model_forward.1} parent=1 // pred_fallthru
      _
    // Predicated region
    $region18: #{quantized_model_forward.1} parent=1 // pred_check
      _
    $region19: #{quantized_model_forward.1} parent=1 // pred_check_branch
      %27 = sbr.rel (0) target = $region21
    $region20: #{quantized_model_forward.1} parent=1 // pred_region
      %28 = dma.done [#allocation3], 16
    $region21: #{quantized_model_forward.1} parent=1 // pred_fallthru
      _
    %29 = sfence
    %v31 = vld [vmem:[%s1] sm:$0xff]
    %v32 = vld [vmem:[%s1 + $0x8] sm:$0xff]
    %v33 = vld [vmem:[%s1 + $0x10] sm:$0xff]
    %v34 = vld [vmem:[%s1 + $0x18] sm:$0xff]
    %v35 = vld [vmem:[%s2] sm:$0xf]
    %v36 = vld [vmem:[%s2 + $0x4] sm:$0xf]
    %v37 = vld [vmem:[%s2 + $0x8] sm:$0xf]
    %v38 = vld [vmem:[%s2 + $0xc] sm:$0xf]
    %v39 = vld [vmem:[%s2 + $0x10] sm:$0xf]
    %v40 = vld [vmem:[%s2 + $0x14] sm:$0xf]
    %v41 = vld [vmem:[%s2 + $0x18] sm:$0xf]
    %v42 = vld [vmem:[%s2 + $0x1c] sm:$0xf]
    %v43 = vld [vmem:[%s2 + $0x20] sm:$0xf]
    %v44 = vld [vmem:[%s2 + $0x24] sm:$0xf]
    %v45 = vld [vmem:[%s2 + $0x28] sm:$0xf]
    %v46 = vld [vmem:[%s2 + $0x2c] sm:$0xf]
    %v47 = vld [vmem:[%s2 + $0x30] sm:$0xf]
    %v48 = vld [vmem:[%s2 + $0x34] sm:$0xf]
    %v49 = vld [vmem:[%s2 + $0x38] sm:$0xf]
    %v50 = vld [vmem:[%s2 + $0x3c] sm:$0xf]
    %v51 = vld [vmem:[%s2 + $0x40] sm:$0xf]
    %v52 = vld [vmem:[%s2 + $0x44] sm:$0xf]
    %v53 = vld [vmem:[%s2 + $0x48] sm:$0xf]
    %v54 = vld [vmem:[%s2 + $0x4c] sm:$0xf]
    %v55 = vld [vmem:[%s2 + $0x50] sm:$0xf]
    %v56 = vld [vmem:[%s2 + $0x54] sm:$0xf]
    %v57 = vld [vmem:[%s2 + $0x58] sm:$0xf]
    %v58 = vld [vmem:[%s2 + $0x5c] sm:$0xf]
    %v59 = vld [vmem:[%s2 + $0x60] sm:$0xf]
    %v60 = vld [vmem:[%s2 + $0x64] sm:$0xf]
    %v61 = vld [vmem:[%s2 + $0x68] sm:$0xf]
    %v62 = vld [vmem:[%s2 + $0x6c] sm:$0xf]
    %v63 = vld [vmem:[%s2 + $0x70] sm:$0xf]
    %v64 = vld [vmem:[%s2 + $0x74] sm:$0xf]
    %v65 = vld [vmem:[%s2 + $0x78] sm:$0xf]
    %v66 = vld [vmem:[%s2 + $0x7c] sm:$0xf]
    %v71 = vunpack.c.l.b16 %v31
    %v72 = vunpack.c.h.b16 %v31
    %v73 = vunpack.c.l.b16 %v32
    %v74 = vunpack.c.h.b16 %v32
    %v75 = vunpack.c.l.b16 %v33
    %v76 = vunpack.c.h.b16 %v33
    %v77 = vunpack.c.l.b16 %v34
    %v78 = vunpack.c.h.b16 %v34
    %v79 = vpack.c.b16 %v73, %v71
    %v80 = vpack.c.b16 %v74, %v72
    %v81 = vpack.c.b16 %v77, %v75
    %v82 = vpack.c.b16 %v78, %v76
    %v119 = vunpack.c.l.b16 %v35
    %v120 = vunpack.c.l.b16 %v36
    %v121 = vunpack.c.l.b16 %v37
    %v122 = vunpack.c.l.b16 %v38
    %v123 = vunpack.c.l.b16 %v39
    %v124 = vunpack.c.l.b16 %v40
    %v125 = vunpack.c.l.b16 %v41
    %v126 = vunpack.c.l.b16 %v42
    %v127 = vunpack.c.l.b16 %v43
    %v128 = vunpack.c.l.b16 %v44
    %v129 = vunpack.c.l.b16 %v45
    %v130 = vunpack.c.l.b16 %v46
    %v131 = vunpack.c.l.b16 %v47
    %v132 = vunpack.c.l.b16 %v48
    %v133 = vunpack.c.l.b16 %v49
    %v134 = vunpack.c.l.b16 %v50
    %v135 = vunpack.c.l.b16 %v51
    %v136 = vunpack.c.l.b16 %v52
    %v137 = vunpack.c.l.b16 %v53
    %v138 = vunpack.c.l.b16 %v54
    %v139 = vunpack.c.l.b16 %v55
    %v140 = vunpack.c.l.b16 %v56
    %v141 = vunpack.c.l.b16 %v57
    %v142 = vunpack.c.l.b16 %v58
    %v143 = vunpack.c.l.b16 %v59
    %v144 = vunpack.c.l.b16 %v60
    %v145 = vunpack.c.l.b16 %v61
    %v146 = vunpack.c.l.b16 %v62
    %v147 = vunpack.c.l.b16 %v63
    %v148 = vunpack.c.l.b16 %v64
    %v149 = vunpack.c.l.b16 %v65
    %v150 = vunpack.c.l.b16 %v66
    %v151 = vpack.c.b16 %v120, %v119
    %v152 = vpack.c.b16 %v122, %v121
    %v153 = vpack.c.b16 %v124, %v123
    %v154 = vpack.c.b16 %v126, %v125
    %v155 = vpack.c.b16 %v128, %v127
    %v156 = vpack.c.b16 %v130, %v129
    %v157 = vpack.c.b16 %v132, %v131
    %v158 = vpack.c.b16 %v134, %v133
    %v159 = vpack.c.b16 %v136, %v135
    %v160 = vpack.c.b16 %v138, %v137
    %v161 = vpack.c.b16 %v140, %v139
    %v162 = vpack.c.b16 %v142, %v141
    %v163 = vpack.c.b16 %v144, %v143
    %v164 = vpack.c.b16 %v146, %v145
    %v165 = vpack.c.b16 %v148, %v147
    %v166 = vpack.c.b16 %v150, %v149
    %183 = vmatprep.subr.bf16.mxu0 0
    %184 = vmatpush1.bf16.msra.mxu0 %v151
    %185 = vmatprep.subr.bf16.mxu0 0
    %186 = vmatpush1.bf16.msra.mxu0 %v152
    %187 = vmatprep.subr.bf16.mxu0 0
    %188 = vmatpush1.bf16.msra.mxu0 %v153
    %189 = vmatprep.subr.bf16.mxu0 0
    %190 = vmatpush1.bf16.msra.mxu0 %v154
    %191 = vmatprep.subr.bf16.mxu0 0
    %192 = vmatpush1.bf16.msra.mxu0 %v155
    %193 = vmatprep.subr.bf16.mxu0 0
    %194 = vmatpush1.bf16.msra.mxu0 %v156
    %195 = vmatprep.subr.bf16.mxu0 0
    %196 = vmatpush1.bf16.msra.mxu0 %v157
    %197 = vmatprep.subr.bf16.mxu0 0
    %198 = vmatpush1.bf16.msra.mxu0 %v158
    %199 = vmatprep.subr.bf16.mxu0 0
    %200 = vmatpush1.bf16.msra.mxu0 %v159
    %201 = vmatprep.subr.bf16.mxu0 0
    %202 = vmatpush1.bf16.msra.mxu0 %v160
    %203 = vmatprep.subr.bf16.mxu0 0
    %204 = vmatpush1.bf16.msra.mxu0 %v161
    %205 = vmatprep.subr.bf16.mxu0 0
    %206 = vmatpush1.bf16.msra.mxu0 %v162
    %207 = vmatprep.subr.bf16.mxu0 0
    %208 = vmatpush1.bf16.msra.mxu0 %v163
    %209 = vmatprep.subr.bf16.mxu0 0
    %210 = vmatpush1.bf16.msra.mxu0 %v164
    %211 = vmatprep.subr.bf16.mxu0 0
    %212 = vmatpush1.bf16.msra.mxu0 %v165
    %213 = vmatprep.subr.bf16.mxu0 0
    %214 = vmatpush1.bf16.msra.mxu0 %v166
    %215 = vmatprep.mubr.bf16.mxu0 %v80
    %216 = vmatmul.mubr.bf16.gmra.mrb[0].mxu0 %v79
    %v217 = vpop.f32.mrb[0].mxu0
    %v218 = vadd.f32 0.0, %v217
    %v219 = vpop.f32.mrb[0].mxu0
    %v220 = vpop.f32.mrb[0].mxu0
    %v221 = vadd.f32 0.0, %v220
    %v222 = vpop.f32.mrb[0].mxu0
    %223 = vmatprep.mubr.bf16.mxu0 %v82
    %224 = vmatmul.mubr.bf16.gmra.mrb[0].mxu0 %v81
    %v225 = vpop.f32.mrb[0].mxu0
    %v226 = vadd.f32 0.0, %v225
    %v227 = vpop.f32.mrb[0].mxu0
    %v228 = vpop.f32.mrb[0].mxu0
    %v229 = vadd.f32 0.0, %v228
    %v230 = vpop.f32.mrb[0].mxu0
    %231 = vdwg.mxu0
    %s232 = sld [smem:[#allocation2]]
    %v233 = vstv %s232
    %v234 = vmul.f32 %v218, %v233
    %v235 = vmul.f32 %v221, %v233
    %v236 = vmul.f32 %v226, %v233
    %v237 = vmul.f32 %v229, %v233
    %v238 = vld [vmem:[%s3] sm:$0x1]
    %v240 = vlaneseq
    %v241 = vshrl.u32 %v240, 7
    %v242 = vsub.s32 0, %v241
    %v243 = vrot.slane %v238, %v242
    %v245 = vadd.f32 %v234, %v243
    %v246 = vadd.f32 %v235, %v243
    %v247 = vadd.f32 %v236, %v243
    %v248 = vadd.f32 %v237, %v243
    %s249 = sld [smem:[#allocation2 + $0x1]]
    %v250 = vstv %s249
    %v251 = vmul.f32 %v245, %v250
    %v252 = vmul.f32 %v246, %v250
    %v253 = vmul.f32 %v247, %v250
    %v254 = vmul.f32 %v248, %v250
    %v255 = vround.ne.pseudo %v251
    %v256 = vround.ne.pseudo %v252
    %v257 = vround.ne.pseudo %v253
    %v258 = vround.ne.pseudo %v254
    %s259 = sld [smem:[#allocation2 + $0x2]]
    %v260 = vstv %s259
    %v261 = vadd.f32 %v255, %v260
    %v262 = vadd.f32 %v256, %v260
    %v263 = vadd.f32 %v257, %v260
    %v264 = vadd.f32 %v258, %v260
    %v265 = vmax.f32 %v260, %v261
    %v266 = vmax.f32 %v260, %v262
    %v267 = vmax.f32 %v260, %v263
    %v268 = vmax.f32 %v260, %v264
    %v269 = vmin.f32 %v265, 255.0
    %v270 = vmin.f32 %v266, 255.0
    %v271 = vmin.f32 %v267, 255.0
    %v272 = vmin.f32 %v268, 255.0
    %v273 = vsub.f32 %v269, %v260
    %v274 = vsub.f32 %v270, %v260
    %v275 = vsub.f32 %v271, %v260
    %v276 = vsub.f32 %v272, %v260
    %s277 = sld [smem:[#allocation2 + $0x3]]
    %v278 = vstv %s277
    %v279 = vmul.f32 %v273, %v278
    %v280 = vmul.f32 %v274, %v278
    %v281 = vmul.f32 %v275, %v278
    %v282 = vmul.f32 %v276, %v278
    %283 = vst [vmem:[%s4] sm:$0xff] %v279
    %284 = vst [vmem:[%s4 + $0x8] sm:$0xff] %v280
    %285 = vst [vmem:[%s4 + $0x10] sm:$0xff] %v281
    %286 = vst [vmem:[%s4 + $0x18] sm:$0xff] %v282
    // Predicated region
    $region22: #{quantized_model_forward.1} parent=1 // pred_check
      _
    $region23: #{quantized_model_forward.1} parent=1 // pred_check_branch
      %288 = sbr.rel (0) target = $region25
    $region24: #{quantized_model_forward.1} parent=1 // pred_region
      _
    $region25: #{quantized_model_forward.1} parent=1 // pred_fallthru
      _
    // Predicated region
    $region26: #{quantized_model_forward.1} parent=1 // pred_check
      _
    $region27: #{quantized_model_forward.1} parent=1 // pred_check_branch
      %290 = sbr.rel (0) target = $region29
    $region28: #{quantized_model_forward.1} parent=1 // pred_region
      _
    $region29: #{quantized_model_forward.1} parent=1 // pred_fallthru
      _
    %291 = vsyncpa [#allocation3], 1

</llo_original>
